<compile_context>
chip_gen: v7x
topology: tpu7x:2x2x1
jax: 0.10.0
libtpu: 0.0.40
codegen_flags: <defaults>
</compile_context>

<pallas_src>
import functools
import math

import jax
import jax.numpy as jnp
from jax.experimental import pallas as pl
from jax.experimental.pallas import tpu as pltpu

MAX_ALPHA = 1.0
MAX_LOG_ALPHA = math.log(MAX_ALPHA - 1e-6)


def _round_up(n, m):
    return ((n + m - 1) // m) * m


def gauss_dropout_kernel(labels_ref, x_ref, eps_ref, alpha_table_ref, o_ref, *, tasks):
    """labels_ref: (TB, 1) int32; x_ref/eps_ref/o_ref: (TB, D); alpha_table_ref: (tasks, D)."""
    labels = labels_ref[...]                                   # (TB, 1) int32
    tb = labels.shape[0]
    d = alpha_table_ref.shape[1]

    # Resolve per-row alpha from the small resident (tasks, D) table with an
    # unrolled chain of selects.  Exact (no matmul rounding), pure VPU work that
    # hides under the HBM-bound data movement.  For very large `tasks` one would
    # switch to one_hot(labels) @ alpha_table on the otherwise-idle MXU.
    alpha = jnp.broadcast_to(alpha_table_ref[0:1, :], (tb, d))  # label == 0 rows
    for t in range(1, tasks):
        alpha = jnp.where(labels == t, alpha_table_ref[t:t + 1, :], alpha)

    x = x_ref[...].astype(jnp.float32)
    eps = eps_ref[...].astype(jnp.float32)
    o_ref[...] = (x * (eps * alpha + 1.0)).astype(o_ref.dtype)


def gauss_dropout_forward(x, epsilon, log_alpha, task_labels, *, block_rows=None):
    """x, epsilon: (B, D); log_alpha: (tasks, D); task_labels: (B,) int. Returns (B, D)."""
    B, D = x.shape
    tasks = log_alpha.shape[0]
    itemsize = jnp.dtype(x.dtype).itemsize

    # Hoisted prep (tiny, done once in XLA instead of per-block in the kernel):
    # clamp(max=log(1-1e-6)) + exp over the (tasks, D) parameter table, and clip
    # labels so a bad label can never reach out-of-range data.
    alpha_table = jnp.exp(
        jnp.minimum(log_alpha.astype(jnp.float32), MAX_LOG_ALPHA))
    labels = jnp.clip(task_labels.astype(jnp.int32), 0, tasks - 1)

    # Batch tile: multiple of 8 sublanes, aim for ~2 MiB per (TB, D) stream block.
    if block_rows is None:
        block_rows = max(8, ((2 * 1024 * 1024) // (D * itemsize)) // 8 * 8)
    TB = max(8, (min(int(block_rows), _round_up(B, 8)) // 8) * 8)

    # Pad the batch so TB divides it exactly (padded rows are sliced off below).
    Bp = _round_up(B, TB)
    if Bp != B:
        pad = Bp - B
        x_p = jnp.pad(x, ((0, pad), (0, 0)))
        eps_p = jnp.pad(epsilon, ((0, pad), (0, 0)))
        labels_p = jnp.pad(labels, ((0, pad),))
    else:
        x_p, eps_p, labels_p = x, epsilon, labels
    labels2d = labels_p.reshape(Bp, 1)

    grid = (Bp // TB,)

    # VMEM budget: x/eps/out blocks double-buffered + lane-padded label block
    # double-buffered + resident alpha table.  Cap well under v7x's 64 MiB.
    est = 2 * (3 * TB * D * itemsize + TB * 128 * 4) + max(tasks, 8) * max(D, 128) * 4
    vmem_limit = int(min(56 * 1024 * 1024, max(32 * 1024 * 1024, 2 * est)))

    grid_spec = pltpu.PrefetchScalarGridSpec(
        num_scalar_prefetch=0,
        grid=grid,
        in_specs=[
            pl.BlockSpec((TB, 1), lambda i: (i, 0)),      # per-row task labels
            pl.BlockSpec((TB, D), lambda i: (i, 0)),      # x
            pl.BlockSpec((TB, D), lambda i: (i, 0)),      # epsilon
            pl.BlockSpec((tasks, D), lambda i: (0, 0)),   # alpha table (resident)
        ],
        out_specs=pl.BlockSpec((TB, D), lambda i: (i, 0)),
    )

    out = pl.pallas_call(
        functools.partial(gauss_dropout_kernel, tasks=tasks),
        out_shape=jax.ShapeDtypeStruct((Bp, D), x.dtype),
        grid_spec=grid_spec,
        compiler_params=pltpu.CompilerParams(
            dimension_semantics=("parallel",),
            vmem_limit_bytes=vmem_limit,
        ),
    )(labels2d, x_p, eps_p, alpha_table)

    return out[:B] if Bp != B else out


def gauss_dropout_reference(x, epsilon, log_alpha, task_labels):
    la = jnp.minimum(log_alpha, MAX_LOG_ALPHA)[task_labels]    # (B, D)
    return x * (epsilon * jnp.exp(la) + 1.0)


if __name__ == "__main__":
    key = jax.random.PRNGKey(0)
    k_x, k_eps, k_pert = jax.random.split(key, 3)

    tasks = 4
    input_size = 128
    batch = 16
    p = 0.5

    # reset_parameters(): constant init log_alpha = log(sqrt(p / (1 - p))), plus a
    # tiny deterministic perturbation so the per-task gather is actually exercised.
    alpha0 = math.sqrt(p / (1.0 - p))
    log_alpha = jnp.full((tasks, input_size), math.log(alpha0), dtype=jnp.float32)
    log_alpha = log_alpha + 0.01 * jax.random.normal(
        k_pert, (tasks, input_size), dtype=jnp.float32
    )

    x = jax.random.normal(k_x, (batch, input_size), dtype=jnp.float32)
    # torch.randn(x.size()) is glue: generate the Gaussian noise in plain JAX and
    # feed it to the kernel (keeps the test deterministic / bit-exact vs reference).
    epsilon = jax.random.normal(k_eps, (batch, input_size), dtype=jnp.float32)
    task_labels = (jnp.arange(batch, dtype=jnp.int32) % tasks).astype(jnp.int32)

    out = gauss_dropout_forward(x, epsilon, log_alpha, task_labels)
    out = jax.block_until_ready(out)

    ref = gauss_dropout_reference(x, epsilon, log_alpha, task_labels)
    assert out.shape == x.shape and out.dtype == x.dtype
    assert jnp.allclose(out, ref, atol=1e-5, rtol=1e-5), "mismatch vs reference"

    print("KERNEL_OK")
</pallas_src>

<mosaic_0001>
module attributes {stable_mosaic.version = 11 : i64} {
  func.func @gauss_dropout_kernel(%arg0: i32, %arg1: memref<16x1xi32, #tpu.memory_space<vmem>>, %arg2: memref<16x128xf32, #tpu.memory_space<vmem>>, %arg3: memref<16x128xf32, #tpu.memory_space<vmem>>, %arg4: memref<4x128xf32, #tpu.memory_space<vmem>>, %arg5: memref<16x128xf32, #tpu.memory_space<vmem>>) attributes {dimension_semantics = [#tpu.dimension_semantics<parallel>], iteration_bounds = array<i64: 1>, scalar_prefetch = 0 : i64, scratch_operands = 0 : i64, tpu.core_type = #tpu.core_type<tc>, window_params = [{transform_indices = @transform_0, window_bounds = array<i64: 16, 1>}, {transform_indices = @transform_1, window_bounds = array<i64: 16, 128>}, {transform_indices = @transform_2, window_bounds = array<i64: 16, 128>}, {pipeline_mode = #tpu.pipeline_mode<synchronous>, transform_indices = @transform_3, window_bounds = array<i64: 4, 128>}, {transform_indices = @transform_4, window_bounds = array<i64: 16, 128>}]} {
    %c0 = arith.constant 0 : index
    %c0_0 = arith.constant 0 : index
    %0 = vector.load %arg1[%c0, %c0_0] : memref<16x1xi32, #tpu.memory_space<vmem>>, vector<16x1xi32>
    %c0_1 = arith.constant 0 : index
    %c0_2 = arith.constant 0 : index
    %1 = vector.load %arg4[%c0_1, %c0_2] : memref<4x128xf32, #tpu.memory_space<vmem>>, vector<1x128xf32>
    %2 = vector.shape_cast %1 : vector<1x128xf32> to vector<1x128xf32>
    %3 = vector.broadcast %2 : vector<1x128xf32> to vector<16x128xf32>
    %c1_i32 = arith.constant 1 : i32
    %4 = vector.broadcast %c1_i32 : i32 to vector<16x1xi32>
    %5 = arith.cmpi eq, %0, %4 : vector<16x1xi32>
    %c1 = arith.constant 1 : index
    %c0_3 = arith.constant 0 : index
    %6 = vector.load %arg4[%c1, %c0_3] : memref<4x128xf32, #tpu.memory_space<vmem>>, vector<1x128xf32>
    %7 = vector.shape_cast %5 : vector<16x1xi1> to vector<16x1xi1>
    %8 = vector.broadcast %7 : vector<16x1xi1> to vector<16x128xi1>
    %9 = vector.shape_cast %6 : vector<1x128xf32> to vector<1x128xf32>
    %10 = vector.broadcast %9 : vector<1x128xf32> to vector<16x128xf32>
    %11 = arith.select %8, %10, %3 : vector<16x128xi1>, vector<16x128xf32>
    %c2_i32 = arith.constant 2 : i32
    %12 = vector.broadcast %c2_i32 : i32 to vector<16x1xi32>
    %13 = arith.cmpi eq, %0, %12 : vector<16x1xi32>
    %c2 = arith.constant 2 : index
    %c0_4 = arith.constant 0 : index
    %14 = vector.load %arg4[%c2, %c0_4] : memref<4x128xf32, #tpu.memory_space<vmem>>, vector<1x128xf32>
    %15 = vector.shape_cast %13 : vector<16x1xi1> to vector<16x1xi1>
    %16 = vector.broadcast %15 : vector<16x1xi1> to vector<16x128xi1>
    %17 = vector.shape_cast %14 : vector<1x128xf32> to vector<1x128xf32>
    %18 = vector.broadcast %17 : vector<1x128xf32> to vector<16x128xf32>
    %19 = arith.select %16, %18, %11 : vector<16x128xi1>, vector<16x128xf32>
    %c3_i32 = arith.constant 3 : i32
    %20 = vector.broadcast %c3_i32 : i32 to vector<16x1xi32>
    %21 = arith.cmpi eq, %0, %20 : vector<16x1xi32>
    %c3 = arith.constant 3 : index
    %c0_5 = arith.constant 0 : index
    %22 = vector.load %arg4[%c3, %c0_5] : memref<4x128xf32, #tpu.memory_space<vmem>>, vector<1x128xf32>
    %23 = vector.shape_cast %21 : vector<16x1xi1> to vector<16x1xi1>
    %24 = vector.broadcast %23 : vector<16x1xi1> to vector<16x128xi1>
    %25 = vector.shape_cast %22 : vector<1x128xf32> to vector<1x128xf32>
    %26 = vector.broadcast %25 : vector<1x128xf32> to vector<16x128xf32>
    %27 = arith.select %24, %26, %19 : vector<16x128xi1>, vector<16x128xf32>
    %c0_6 = arith.constant 0 : index
    %c0_7 = arith.constant 0 : index
    %28 = vector.load %arg2[%c0_6, %c0_7] : memref<16x128xf32, #tpu.memory_space<vmem>>, vector<16x128xf32>
    %c0_8 = arith.constant 0 : index
    %c0_9 = arith.constant 0 : index
    %29 = vector.load %arg3[%c0_8, %c0_9] : memref<16x128xf32, #tpu.memory_space<vmem>>, vector<16x128xf32>
    %30 = arith.mulf %29, %27 : vector<16x128xf32>
    %cst = arith.constant 1.000000e+00 : f32
    %31 = vector.broadcast %cst : f32 to vector<16x128xf32>
    %32 = arith.addf %30, %31 : vector<16x128xf32>
    %33 = arith.mulf %28, %32 : vector<16x128xf32>
    %c0_10 = arith.constant 0 : index
    %c0_11 = arith.constant 0 : index
    %34 = vector.load %arg5[%c0_10, %c0_11] : memref<16x128xf32, #tpu.memory_space<vmem>>, vector<16x128xf32>
    tpu.vector_store %arg5[%c0_10, %c0_11], %33 {strides = array<i32>} : memref<16x128xf32, #tpu.memory_space<vmem>>, vector<16x128xf32>,
    return
  }
  func.func @transform_0(%arg0: i32) -> (i32, i32) {
    %c0_i32 = arith.constant 0 : i32
    %c0_i32_0 = arith.constant 0 : i32
    return %arg0, %c0_i32 : i32, i32
  }
  func.func @transform_1(%arg0: i32) -> (i32, i32) {
    %c0_i32 = arith.constant 0 : i32
    %c0_i32_0 = arith.constant 0 : i32
    return %arg0, %c0_i32 : i32, i32
  }
  func.func @transform_2(%arg0: i32) -> (i32, i32) {
    %c0_i32 = arith.constant 0 : i32
    %c0_i32_0 = arith.constant 0 : i32
    return %arg0, %c0_i32 : i32, i32
  }
  func.func @transform_3(%arg0: i32) -> (i32, i32) {
    %c0_i32 = arith.constant 0 : i32
    %c0_i32_0 = arith.constant 0 : i32
    %c0_i32_1 = arith.constant 0 : i32
    return %c0_i32, %c0_i32_0 : i32, i32
  }
  func.func @transform_4(%arg0: i32) -> (i32, i32) {
    %c0_i32 = arith.constant 0 : i32
    %c0_i32_0 = arith.constant 0 : i32
    return %arg0, %c0_i32 : i32, i32
  }
}

</mosaic_0001>

<llo_original>
// kernel: tpu_custom_call.1
$region0: #{tpu_custom_call.1}
  #allocation0 [shape = 'u32[]', space=smem, size = 0x4, offset = 0x4, fixed_abs, tag = 'smem constant byte address 0x4 - core index']
  #allocation1 [shape = 'u32[144,128]{1,0:T(1,128)}', space=vmem, size = 0x12000, scoped, tag = 'internal scratch']
  %s0 = inlined_call_operand.vmem [shape: s32[16,1], index: 0, kind: input, shape index: {}]
  %s1 = inlined_call_operand.vmem [shape: f32[16,128], index: 1, kind: input, shape index: {}]
  %s2 = inlined_call_operand.hbm [shape: f32[16,128], index: 2, kind: input, shape index: {}]
  %s3 = inlined_call_operand.vmem [shape: f32[4,128], index: 3, kind: input, shape index: {}]
  %s4 = inlined_call_operand.hbm [shape: f32[16,128], index: 4, kind: output, shape index: {}]
  %s5 = sld [smem:[#allocation0]]
  $region30: #{tpu_custom_call.1} parent=0
    _
  %s7 = ssub.s32 1, %s5
  %s8 = scalar_select 0, %s7, %s5
  $region1: #{tpu_custom_call.1} parent=0
    #allocation2 [shape = 'u8[8192]{0}', space=vmem, size = 0x2000, scoped, tag = 'input window, operand 2, single buffered']
    #allocation3 [shape = 's32[1]{0}', space=sflag, size = 0x4, scoped, tag = 'scoped memory for tpu_custom_call.1']
    #allocation4 [shape = 's32[1]{0}', space=sflag, size = 0x4, scoped, tag = 'scoped memory for tpu_custom_call.1']
    #allocation5 [shape = 'u8[8192]{0}', space=vmem, size = 0x2000, scoped, tag = 'output window, operand 0, single buffered']
    %9 = vsyncpa [#allocation3], 0
    %10 = vsyncpa [#allocation4], 0
    // Predicated region
    $region2: #{tpu_custom_call.1} parent=1 // pred_check
      _
    $region3: #{tpu_custom_call.1} parent=1 // pred_check_branch
      %12 = sbr.rel (0) target = $region5
    $region4: #{tpu_custom_call.1} parent=1 // pred_region
      _
    $region5: #{tpu_custom_call.1} parent=1 // pred_fallthru
      _
    // Predicated region
    $region6: #{tpu_custom_call.1} parent=1 // pred_check
      _
    $region7: #{tpu_custom_call.1} parent=1 // pred_check_branch
      %14 = sbr.rel (0) target = $region9
    $region8: #{tpu_custom_call.1} parent=1 // pred_region
      _
    $region9: #{tpu_custom_call.1} parent=1 // pred_fallthru
      _
    // Predicated region
    $region10: #{tpu_custom_call.1} parent=1 // pred_check
      _
    $region11: #{tpu_custom_call.1} parent=1 // pred_check_branch
      %16 = sbr.rel (0) target = $region13
    $region12: #{tpu_custom_call.1} parent=1 // pred_region
      %s18 = ssub.s32 256, 256
      %19 = vsyncadd [#allocation3], %s18
      %s20 = sshll.u32 [#allocation2], 4
      %s21 = int_to_ptr.vmem [resolvable:$true] %s20
      %26 = dma.hbm_to_vmem [thread:$0]  %s2, 256, %s21, [#allocation3], 128, 128, 8
    $region13: #{tpu_custom_call.1} parent=1 // pred_fallthru
      _
    // Predicated region
    $region14: #{tpu_custom_call.1} parent=1 // pred_check
      _
    $region15: #{tpu_custom_call.1} parent=1 // pred_check_branch
      %28 = sbr.rel (0) target = $region17
    $region16: #{tpu_custom_call.1} parent=1 // pred_region
      _
    $region17: #{tpu_custom_call.1} parent=1 // pred_fallthru
      _
    // Predicated region
    $region18: #{tpu_custom_call.1} parent=1 // pred_check
      _
    $region19: #{tpu_custom_call.1} parent=1 // pred_check_branch
      %30 = sbr.rel (0) target = $region21
    $region20: #{tpu_custom_call.1} parent=1 // pred_region
      %31 = dma.done [#allocation3], 256
    $region21: #{tpu_custom_call.1} parent=1 // pred_fallthru
      _
    %v32 = vld [vmem:[%s0] sm:$0xff]
    %v33 = vld [vmem:[%s0 + $0x8] sm:$0xff]
    %v34 = vld [vmem:[%s3] sm:$0x1]
    %v35 = vlaneseq
    %v36 = vshrl.u32 %v35, 7
    %v37 = vsub.s32 0, %v36
    %v38 = vrot.slane %v34, %v37
    %vm39 = vcmp.eq.s32.totalorder %v32, 1
    %vm40 = vcmp.eq.s32.totalorder %v33, 1
    %v41 = vld [vmem:[%s3 + $0x1] sm:$0x1]
    %v42 = vsel %vm39, 1, 0
    %v43 = vsel %vm40, 1, 0
    %44 = vset.pattern.permute.xlu0 0
    %45 = vperm.xlu0 %44, %v42
    %v46 = vpop.permute.xlu0 %45
    %47 = vset.pattern.permute.xlu0 0
    %48 = vperm.xlu0 %47, %v43
    %v49 = vpop.permute.xlu0 %48
    %vm50 = vcmp.eq.s32.totalorder %v46, 1
    %vm51 = vcmp.eq.s32.totalorder %v49, 1
    %v52 = vlaneseq
    %v53 = vshrl.u32 %v52, 7
    %v54 = vsub.s32 0, %v53
    %v55 = vrot.slane %v41, %v54
    %v56 = vsel %vm50, %v55, %v38
    %v57 = vsel %vm51, %v55, %v38
    %vm58 = vcmp.eq.s32.totalorder %v32, 2
    %vm59 = vcmp.eq.s32.totalorder %v33, 2
    %v60 = vld [vmem:[%s3 + $0x2] sm:$0x1]
    %v61 = vsel %vm58, 1, 0
    %v62 = vsel %vm59, 1, 0
    %63 = vset.pattern.permute.xlu0 0
    %64 = vperm.xlu0 %63, %v61
    %v65 = vpop.permute.xlu0 %64
    %66 = vset.pattern.permute.xlu0 0
    %67 = vperm.xlu0 %66, %v62
    %v68 = vpop.permute.xlu0 %67
    %vm69 = vcmp.eq.s32.totalorder %v65, 1
    %vm70 = vcmp.eq.s32.totalorder %v68, 1
    %v71 = vlaneseq
    %v72 = vshrl.u32 %v71, 7
    %v73 = vsub.s32 0, %v72
    %v74 = vrot.slane %v60, %v73
    %v75 = vsel %vm69, %v74, %v56
    %v76 = vsel %vm70, %v74, %v57
    %vm77 = vcmp.eq.s32.totalorder %v32, 3
    %vm78 = vcmp.eq.s32.totalorder %v33, 3
    %v79 = vld [vmem:[%s3 + $0x3] sm:$0x1]
    %v80 = vsel %vm77, 1, 0
    %v81 = vsel %vm78, 1, 0
    %82 = vset.pattern.permute.xlu0 0
    %83 = vperm.xlu0 %82, %v80
    %v84 = vpop.permute.xlu0 %83
    %85 = vset.pattern.permute.xlu0 0
    %86 = vperm.xlu0 %85, %v81
    %v87 = vpop.permute.xlu0 %86
    %vm88 = vcmp.eq.s32.totalorder %v84, 1
    %vm89 = vcmp.eq.s32.totalorder %v87, 1
    %v90 = vlaneseq
    %v91 = vshrl.u32 %v90, 7
    %v92 = vsub.s32 0, %v91
    %v93 = vrot.slane %v79, %v92
    %v94 = vsel %vm88, %v93, %v75
    %v95 = vsel %vm89, %v93, %v76
    %v96 = vld [vmem:[%s1] sm:$0xff]
    %v97 = vld [vmem:[%s1 + $0x8] sm:$0xff]
    %v98 = vld [vmem:[#allocation2] sm:$0xff]
    %v99 = vld [vmem:[#allocation2 + $0x8] sm:$0xff]
    %v100 = vmul.f32 %v98, %v94
    %v101 = vmul.f32 %v99, %v95
    %v102 = vadd.f32 %v100, 1.0
    %v103 = vadd.f32 %v101, 1.0
    %v104 = vmul.f32 %v96, %v102
    %v105 = vmul.f32 %v97, %v103
    %106 = vst [vmem:[#allocation5] sm:$0xff] %v104
    %107 = vst [vmem:[#allocation5 + $0x8] sm:$0xff] %v105
    // Predicated region
    $region22: #{tpu_custom_call.1} parent=1 // pred_check
      _
    $region23: #{tpu_custom_call.1} parent=1 // pred_check_branch
      %109 = sbr.rel (0) target = $region25
    $region24: #{tpu_custom_call.1} parent=1 // pred_region
      %s111 = ssub.s32 256, 256
      %112 = vsyncadd [#allocation4], %s111
      %s113 = sshll.u32 [#allocation5], 4
      %s114 = int_to_ptr.vmem [resolvable:$true] %s113
      %119 = dma.vmem_to_hbm [thread:$0]  %s114, 256, %s4, [#allocation4], 128, 128, 8
    $region25: #{tpu_custom_call.1} parent=1 // pred_fallthru
      _
    // Predicated region
    $region26: #{tpu_custom_call.1} parent=1 // pred_check
      _
    $region27: #{tpu_custom_call.1} parent=1 // pred_check_branch
      %121 = sbr.rel (0) target = $region29
    $region28: #{tpu_custom_call.1} parent=1 // pred_region
      %122 = dma.done [#allocation4], 256
    $region29: #{tpu_custom_call.1} parent=1 // pred_fallthru
      _
    %123 = vsyncpa [#allocation3], 1
    %124 = vsyncpa [#allocation4], 1

</llo_original>
